<compile_context>
chip_gen: v7x
topology: tpu7x:2x2x1
jax: 0.10.0
libtpu: 0.0.40
codegen_flags: <defaults>
</compile_context>

<pallas_src>
import jax
import jax.numpy as jnp
from jax import lax
from jax.experimental import pallas as pl
from jax.experimental.pallas import tpu as pltpu


def _attention_kernel(x_ref, wq_ref, wk_ref, wv_ref, wproj_ref, bias_ref,
                      out_ref, attn_ref, acc_ref):
    h = pl.program_id(1)
    last_h = pl.num_programs(1) - 1

    x = x_ref[0]                      # (N, C)  bf16
    wq = wq_ref[0]                    # (C, D)  bf16 (softmax scale pre-folded)
    wk = wk_ref[0]                    # (C, D)  bf16
    wv = wv_ref[0]                    # (C, D)  bf16

    # Per-head Q/K/V projections on the MXU, f32 accumulation.
    q = jnp.dot(x, wq, preferred_element_type=jnp.float32)      # (N, D)
    k = jnp.dot(x, wk, preferred_element_type=jnp.float32)      # (N, D)
    v = jnp.dot(x, wv, preferred_element_type=jnp.float32)      # (N, D)

    # scores = q @ k^T without an explicit transpose: contract last dims.
    s = lax.dot_general(q.astype(jnp.bfloat16), k.astype(jnp.bfloat16),
                        (((1,), (1,)), ((), ())),
                        preferred_element_type=jnp.float32)      # (N, N)

    # f32 softmax along the key axis; approximate reciprocal uses the EUP slot.
    m = jnp.max(s, axis=-1, keepdims=True)
    p = jnp.exp(s - m)
    attn = p * pl.reciprocal(jnp.sum(p, axis=-1, keepdims=True), approx=True)
    attn_ref[0, 0] = attn.astype(attn_ref.dtype)

    # This head's contribution to the output projection, accumulated over h.
    head_out = jnp.dot(attn.astype(jnp.bfloat16), v.astype(jnp.bfloat16),
                       preferred_element_type=jnp.float32)       # (N, D)
    contrib = jnp.dot(head_out.astype(jnp.bfloat16), wproj_ref[0],
                      preferred_element_type=jnp.float32)        # (N, C)

    @pl.when(h == 0)
    def _():
        acc_ref[...] = jnp.zeros_like(acc_ref)

    acc_ref[...] += contrib

    @pl.when(h == last_h)
    def _():
        out_ref[0] = (acc_ref[...] + bias_ref[...]).astype(out_ref.dtype)


def attention_forward(x, wqkv_t, wproj_t, bproj, *, num_heads, qk_scale=None):
    """x: (B, N, C); wqkv_t: (C, 3C); wproj_t: (C, C); bproj: (C,).

    Weights are the PyTorch nn.Linear weights already transposed to
    (in_features, out_features).  Returns (out (B,N,C), attn (B,H,N,N)).
    """
    B, N, C = x.shape
    H = num_heads
    D = C // H
    scale = qk_scale if qk_scale is not None else D ** (-0.5)

    # Head-major weight layout, computed once outside the kernel (folded by
    # XLA): wq/wk/wv are (H, C, D), wproj is (H, D, C).  Scale folded into wq.
    def head_major(w):
        return w.reshape(C, H, D).transpose(1, 0, 2)

    wq = head_major(wqkv_t[:, 0 * C:1 * C] * scale).astype(jnp.bfloat16)
    wk = head_major(wqkv_t[:, 1 * C:2 * C]).astype(jnp.bfloat16)
    wv = head_major(wqkv_t[:, 2 * C:3 * C]).astype(jnp.bfloat16)
    wp = wproj_t.reshape(H, D, C).astype(jnp.bfloat16)
    bias = bproj.reshape(1, C).astype(jnp.float32)
    x_bf = x.astype(jnp.bfloat16)      # halves activation DMA bytes

    out_shapes = (
        jax.ShapeDtypeStruct((B, N, C), x.dtype),           # projected output
        jax.ShapeDtypeStruct((B, H, N, N), jnp.float32),    # attention weights
    )

    grid_spec = pltpu.PrefetchScalarGridSpec(
        num_scalar_prefetch=0,
        grid=(B, H),
        in_specs=[
            pl.BlockSpec((1, N, C), lambda b, h: (b, 0, 0)),        # x (reused over h)
            pl.BlockSpec((1, C, D), lambda b, h: (h, 0, 0)),        # wq[h]
            pl.BlockSpec((1, C, D), lambda b, h: (h, 0, 0)),        # wk[h]
            pl.BlockSpec((1, C, D), lambda b, h: (h, 0, 0)),        # wv[h]
            pl.BlockSpec((1, D, C), lambda b, h: (h, 0, 0)),        # wproj[h]
            pl.BlockSpec((1, C), lambda b, h: (0, 0)),              # bias
        ],
        out_specs=[
            pl.BlockSpec((1, N, C), lambda b, h: (b, 0, 0)),        # out (acc over h)
            pl.BlockSpec((1, 1, N, N), lambda b, h: (b, h, 0, 0)),  # attn[b, h]
        ],
        scratch_shapes=[pltpu.VMEM((N, C), jnp.float32)],
    )

    return pl.pallas_call(
        _attention_kernel,
        out_shape=out_shapes,
        grid_spec=grid_spec,
        compiler_params=pltpu.CompilerParams(
            dimension_semantics=("parallel", "arbitrary")),
    )(x_bf, wq, wk, wv, wp, bias)


def reference_attention(x, wqkv_t, wproj_t, bproj, *, num_heads):
    """Plain-JAX f32 mirror of the PyTorch forward (mask=None, eval mode)."""
    B, N, C = x.shape
    D = C // num_heads
    scale = D ** (-0.5)

    qkv = x @ wqkv_t                                            # (B, N, 3C)
    qkv = qkv.reshape(B, N, 3, num_heads, D).transpose(2, 0, 3, 1, 4)
    q, k, v = qkv[0], qkv[1], qkv[2]                            # (B, H, N, D)
    attn = (q @ jnp.swapaxes(k, -2, -1)) * scale                # (B, H, N, N)
    attn = jax.nn.softmax(attn, axis=-1)
    out = (attn @ v).transpose(0, 2, 1, 3).reshape(B, N, C)
    out = out @ wproj_t + bproj
    return out, attn


if __name__ == "__main__":
    # Small shapes consistent with the module: dim=C=32, num_heads=8, seq N=8.
    B, N, C = 2, 8, 32
    NUM_HEADS = 8

    key = jax.random.PRNGKey(0)
    kx, kqkv, kproj, kb = jax.random.split(key, 4)

    x = jax.random.normal(kx, (B, N, C), dtype=jnp.float32)
    # nn.Linear(dim, dim*3, bias=False) -> weight (3C, C); stored transposed (C, 3C).
    wqkv_t = jax.random.normal(kqkv, (C, 3 * C), dtype=jnp.float32) * (1.0 / C ** 0.5)
    # nn.Linear(dim, dim) -> weight (C, C) + bias (C,); stored transposed (C, C).
    wproj_t = jax.random.normal(kproj, (C, C), dtype=jnp.float32) * (1.0 / C ** 0.5)
    bproj = jax.random.normal(kb, (C,), dtype=jnp.float32) * 0.01

    out, attn = attention_forward(x, wqkv_t, wproj_t, bproj, num_heads=NUM_HEADS)
    out = jax.block_until_ready(out)
    attn = jax.block_until_ready(attn)

    ref_out, ref_attn = reference_attention(x, wqkv_t, wproj_t, bproj,
                                            num_heads=NUM_HEADS)

    assert out.shape == (B, N, C)
    assert attn.shape == (B, NUM_HEADS, N, N)
    # bf16 MXU operands + approx reciprocal => looser tolerances than pure f32.
    assert jnp.allclose(out, ref_out, atol=3e-2, rtol=3e-2), \
        float(jnp.max(jnp.abs(out - ref_out)))
    assert jnp.allclose(attn, ref_attn, atol=3e-2, rtol=3e-2), \
        float(jnp.max(jnp.abs(attn - ref_attn)))

    print("KERNEL_OK")
</pallas_src>

<mosaic_0001>
module attributes {stable_mosaic.version = 11 : i64} {
  func.func @_attention_kernel(%arg0: i32, %arg1: i32, %arg2: memref<1x8x32xbf16, #tpu.memory_space<vmem>>, %arg3: memref<1x32x4xbf16, #tpu.memory_space<vmem>>, %arg4: memref<1x32x4xbf16, #tpu.memory_space<vmem>>, %arg5: memref<1x32x4xbf16, #tpu.memory_space<vmem>>, %arg6: memref<1x4x32xbf16, #tpu.memory_space<vmem>>, %arg7: memref<1x32xf32, #tpu.memory_space<vmem>>, %arg8: memref<1x8x32xf32, #tpu.memory_space<vmem>>, %arg9: memref<1x1x8x8xf32, #tpu.memory_space<vmem>>, %arg10: memref<8x32xf32, #tpu.memory_space<vmem>>) attributes {dimension_semantics = [#tpu.dimension_semantics<parallel>, #tpu.dimension_semantics<arbitrary>], iteration_bounds = array<i64: 2, 8>, scalar_prefetch = 0 : i64, scratch_operands = 1 : i64, tpu.core_type = #tpu.core_type<tc>, window_params = [{transform_indices = @transform_0, window_bounds = array<i64: 1, 8, 32>}, {transform_indices = @transform_1, window_bounds = array<i64: 1, 32, 4>}, {transform_indices = @transform_2, window_bounds = array<i64: 1, 32, 4>}, {transform_indices = @transform_3, window_bounds = array<i64: 1, 32, 4>}, {transform_indices = @transform_4, window_bounds = array<i64: 1, 4, 32>}, {pipeline_mode = #tpu.pipeline_mode<synchronous>, transform_indices = @transform_5, window_bounds = array<i64: 1, 32>}, {transform_indices = @transform_6, window_bounds = array<i64: 1, 8, 32>}, {transform_indices = @transform_7, window_bounds = array<i64: 1, 1, 8, 8>}]} {
    %c0 = arith.constant 0 : index
    %c0_0 = arith.constant 0 : index
    %c0_1 = arith.constant 0 : index
    %0 = vector.load %arg2[%c0, %c0_0, %c0_1] : memref<1x8x32xbf16, #tpu.memory_space<vmem>>, vector<1x8x32xbf16>
    %1 = vector.shape_cast %0 : vector<1x8x32xbf16> to vector<8x32xbf16>
    %c0_2 = arith.constant 0 : index
    %c0_3 = arith.constant 0 : index
    %c0_4 = arith.constant 0 : index
    %2 = vector.load %arg3[%c0_2, %c0_3, %c0_4] : memref<1x32x4xbf16, #tpu.memory_space<vmem>>, vector<1x32x4xbf16>
    %3 = vector.shape_cast %2 : vector<1x32x4xbf16> to vector<32x4xbf16>
    %c0_5 = arith.constant 0 : index
    %c0_6 = arith.constant 0 : index
    %c0_7 = arith.constant 0 : index
    %4 = vector.load %arg4[%c0_5, %c0_6, %c0_7] : memref<1x32x4xbf16, #tpu.memory_space<vmem>>, vector<1x32x4xbf16>
    %5 = vector.shape_cast %4 : vector<1x32x4xbf16> to vector<32x4xbf16>
    %c0_8 = arith.constant 0 : index
    %c0_9 = arith.constant 0 : index
    %c0_10 = arith.constant 0 : index
    %6 = vector.load %arg5[%c0_8, %c0_9, %c0_10] : memref<1x32x4xbf16, #tpu.memory_space<vmem>>, vector<1x32x4xbf16>
    %7 = vector.shape_cast %6 : vector<1x32x4xbf16> to vector<32x4xbf16>
    %cst = arith.constant dense<0.000000e+00> : vector<8x4xf32>
    %8 = tpu.matmul %1, %3, %cst {dimension_numbers = #tpu.dot_dimension_numbers<[1], [0], [0], [1], [0, 0, 1, 1], [], []>} : vector<8x32xbf16>, vector<32x4xbf16>, vector<8x4xf32> -> vector<8x4xf32>
    %cst_11 = arith.constant dense<0.000000e+00> : vector<8x4xf32>
    %9 = tpu.matmul %1, %5, %cst_11 {dimension_numbers = #tpu.dot_dimension_numbers<[1], [0], [0], [1], [0, 0, 1, 1], [], []>} : vector<8x32xbf16>, vector<32x4xbf16>, vector<8x4xf32> -> vector<8x4xf32>
    %cst_12 = arith.constant dense<0.000000e+00> : vector<8x4xf32>
    %10 = tpu.matmul %1, %7, %cst_12 {dimension_numbers = #tpu.dot_dimension_numbers<[1], [0], [0], [1], [0, 0, 1, 1], [], []>} : vector<8x32xbf16>, vector<32x4xbf16>, vector<8x4xf32> -> vector<8x4xf32>
    %11 = arith.truncf %8 : vector<8x4xf32> to vector<8x4xbf16>
    %12 = arith.truncf %9 : vector<8x4xf32> to vector<8x4xbf16>
    %cst_13 = arith.constant dense<0.000000e+00> : vector<8x8xf32>
    %13 = tpu.matmul %11, %12, %cst_13 {dimension_numbers = #tpu.dot_dimension_numbers<[1], [1], [0], [0], [0, 0, 1, 0], [], []>} : vector<8x4xbf16>, vector<8x4xbf16>, vector<8x8xf32> -> vector<8x8xf32>
    %cst_14 = arith.constant dense<0xFF800000> : vector<8xf32>
    %14 = vector.multi_reduction <maximumf>, %13, %cst_14 [1] : vector<8x8xf32> to vector<8xf32>
    %15 = vector.shape_cast %14 : vector<8xf32> to vector<8x1xf32>
    %16 = vector.broadcast %15 : vector<8x1xf32> to vector<8x8xf32>
    %17 = arith.subf %13, %16 : vector<8x8xf32>
    %18 = math.exp %17 : vector<8x8xf32>
    %cst_15 = arith.constant dense<0.000000e+00> : vector<8xf32>
    %19 = vector.multi_reduction <add>, %18, %cst_15 [1] : vector<8x8xf32> to vector<8xf32>
    %20 = vector.shape_cast %19 : vector<8xf32> to vector<8x1xf32>
    %21 = tpu.reciprocal %20 {approx = true} : vector<8x1xf32> -> vector<8x1xf32>
    %22 = vector.broadcast %21 : vector<8x1xf32> to vector<8x8xf32>
    %23 = arith.mulf %18, %22 : vector<8x8xf32>
    %c0_16 = arith.constant 0 : index
    %c0_17 = arith.constant 0 : index
    %c0_18 = arith.constant 0 : index
    %c0_19 = arith.constant 0 : index
    %24 = vector.load %arg9[%c0_16, %c0_17, %c0_18, %c0_19] : memref<1x1x8x8xf32, #tpu.memory_space<vmem>>, vector<1x1x8x8xf32>
    %25 = vector.shape_cast %24 : vector<1x1x8x8xf32> to vector<8x8xf32>
    %26 = vector.shape_cast %23 : vector<8x8xf32> to vector<1x1x8x8xf32>
    tpu.vector_store %arg9[%c0_16, %c0_17, %c0_18, %c0_19], %26 {strides = array<i32>} : memref<1x1x8x8xf32, #tpu.memory_space<vmem>>, vector<1x1x8x8xf32>,
    %27 = arith.truncf %23 : vector<8x8xf32> to vector<8x8xbf16>
    %28 = arith.truncf %10 : vector<8x4xf32> to vector<8x4xbf16>
    %cst_20 = arith.constant dense<0.000000e+00> : vector<8x4xf32>
    %29 = tpu.matmul %27, %28, %cst_20 {dimension_numbers = #tpu.dot_dimension_numbers<[1], [0], [0], [1], [0, 0, 1, 1], [], []>} : vector<8x8xbf16>, vector<8x4xbf16>, vector<8x4xf32> -> vector<8x4xf32>
    %30 = arith.truncf %29 : vector<8x4xf32> to vector<8x4xbf16>
    %c0_21 = arith.constant 0 : index
    %c0_22 = arith.constant 0 : index
    %c0_23 = arith.constant 0 : index
    %31 = vector.load %arg6[%c0_21, %c0_22, %c0_23] : memref<1x4x32xbf16, #tpu.memory_space<vmem>>, vector<1x4x32xbf16>
    %32 = vector.shape_cast %31 : vector<1x4x32xbf16> to vector<4x32xbf16>
    %cst_24 = arith.constant dense<0.000000e+00> : vector<8x32xf32>
    %33 = tpu.matmul %30, %32, %cst_24 {dimension_numbers = #tpu.dot_dimension_numbers<[1], [0], [0], [1], [0, 0, 1, 1], [], []>} : vector<8x4xbf16>, vector<4x32xbf16>, vector<8x32xf32> -> vector<8x32xf32>
    %c0_i32 = arith.constant 0 : i32
    %34 = arith.cmpi eq, %arg1, %c0_i32 : i32
    %35 = arith.extui %34 : i1 to i32
    %c0_i32_25 = arith.constant 0 : i32
    %36 = arith.cmpi ne, %35, %c0_i32_25 : i32
    scf.if %36 {
      %cst_31 = arith.constant 0.000000e+00 : f32
      %43 = vector.broadcast %cst_31 : f32 to vector<8x32xf32>
      %c0_32 = arith.constant 0 : index
      %c0_33 = arith.constant 0 : index
      %44 = vector.load %arg10[%c0_32, %c0_33] : memref<8x32xf32, #tpu.memory_space<vmem>>, vector<8x32xf32>
      tpu.vector_store %arg10[%c0_32, %c0_33], %43 {strides = array<i32>} : memref<8x32xf32, #tpu.memory_space<vmem>>, vector<8x32xf32>,
    } else {
    }
    %c0_26 = arith.constant 0 : index
    %c0_27 = arith.constant 0 : index
    %37 = vector.load %arg10[%c0_26, %c0_27] : memref<8x32xf32, #tpu.memory_space<vmem>>, vector<8x32xf32>
    %38 = arith.addf %37, %33 : vector<8x32xf32>
    %c0_28 = arith.constant 0 : index
    %c0_29 = arith.constant 0 : index
    %39 = vector.load %arg10[%c0_28, %c0_29] : memref<8x32xf32, #tpu.memory_space<vmem>>, vector<8x32xf32>
    tpu.vector_store %arg10[%c0_28, %c0_29], %38 {strides = array<i32>} : memref<8x32xf32, #tpu.memory_space<vmem>>, vector<8x32xf32>,
    %c7_i32 = arith.constant 7 : i32
    %40 = arith.cmpi eq, %arg1, %c7_i32 : i32
    %41 = arith.extui %40 : i1 to i32
    %c0_i32_30 = arith.constant 0 : i32
    %42 = arith.cmpi ne, %41, %c0_i32_30 : i32
    scf.if %42 {
      %c0_31 = arith.constant 0 : index
      %c0_32 = arith.constant 0 : index
      %43 = vector.load %arg10[%c0_31, %c0_32] : memref<8x32xf32, #tpu.memory_space<vmem>>, vector<8x32xf32>
      %c0_33 = arith.constant 0 : index
      %c0_34 = arith.constant 0 : index
      %44 = vector.load %arg7[%c0_33, %c0_34] : memref<1x32xf32, #tpu.memory_space<vmem>>, vector<1x32xf32>
      %45 = vector.broadcast %44 : vector<1x32xf32> to vector<8x32xf32>
      %46 = arith.addf %43, %45 : vector<8x32xf32>
      %c0_35 = arith.constant 0 : index
      %c0_36 = arith.constant 0 : index
      %c0_37 = arith.constant 0 : index
      %47 = vector.load %arg8[%c0_35, %c0_36, %c0_37] : memref<1x8x32xf32, #tpu.memory_space<vmem>>, vector<1x8x32xf32>
      %48 = vector.shape_cast %47 : vector<1x8x32xf32> to vector<8x32xf32>
      %49 = vector.shape_cast %46 : vector<8x32xf32> to vector<1x8x32xf32>
      tpu.vector_store %arg8[%c0_35, %c0_36, %c0_37], %49 {strides = array<i32>} : memref<1x8x32xf32, #tpu.memory_space<vmem>>, vector<1x8x32xf32>,
    } else {
    }
    return
  }
  func.func @transform_0(%arg0: i32, %arg1: i32) -> (i32, i32, i32) {
    %c0_i32 = arith.constant 0 : i32
    %c0_i32_0 = arith.constant 0 : i32
    %c0_i32_1 = arith.constant 0 : i32
    return %arg0, %c0_i32, %c0_i32_0 : i32, i32, i32
  }
  func.func @transform_1(%arg0: i32, %arg1: i32) -> (i32, i32, i32) {
    %c0_i32 = arith.constant 0 : i32
    %c0_i32_0 = arith.constant 0 : i32
    %c0_i32_1 = arith.constant 0 : i32
    return %arg1, %c0_i32, %c0_i32_0 : i32, i32, i32
  }
  func.func @transform_2(%arg0: i32, %arg1: i32) -> (i32, i32, i32) {
    %c0_i32 = arith.constant 0 : i32
    %c0_i32_0 = arith.constant 0 : i32
    %c0_i32_1 = arith.constant 0 : i32
    return %arg1, %c0_i32, %c0_i32_0 : i32, i32, i32
  }
  func.func @transform_3(%arg0: i32, %arg1: i32) -> (i32, i32, i32) {
    %c0_i32 = arith.constant 0 : i32
    %c0_i32_0 = arith.constant 0 : i32
    %c0_i32_1 = arith.constant 0 : i32
    return %arg1, %c0_i32, %c0_i32_0 : i32, i32, i32
  }
  func.func @transform_4(%arg0: i32, %arg1: i32) -> (i32, i32, i32) {
    %c0_i32 = arith.constant 0 : i32
    %c0_i32_0 = arith.constant 0 : i32
    %c0_i32_1 = arith.constant 0 : i32
    return %arg1, %c0_i32, %c0_i32_0 : i32, i32, i32
  }
  func.func @transform_5(%arg0: i32, %arg1: i32) -> (i32, i32) {
    %c0_i32 = arith.constant 0 : i32
    %c0_i32_0 = arith.constant 0 : i32
    %c0_i32_1 = arith.constant 0 : i32
    return %c0_i32, %c0_i32_0 : i32, i32
  }
  func.func @transform_6(%arg0: i32, %arg1: i32) -> (i32, i32, i32) {
    %c0_i32 = arith.constant 0 : i32
    %c0_i32_0 = arith.constant 0 : i32
    %c0_i32_1 = arith.constant 0 : i32
    return %arg0, %c0_i32, %c0_i32_0 : i32, i32, i32
  }
  func.func @transform_7(%arg0: i32, %arg1: i32) -> (i32, i32, i32, i32) {
    %c0_i32 = arith.constant 0 : i32
    %c0_i32_0 = arith.constant 0 : i32
    %c0_i32_1 = arith.constant 0 : i32
    return %arg0, %arg1, %c0_i32, %c0_i32_0 : i32, i32, i32, i32
  }
}

</mosaic_0001>

<llo_original>
// kernel: tpu_custom_call.1
$region0: #{tpu_custom_call.1}
  #allocation0 [shape = 'u32[]', space=smem, size = 0x4, offset = 0x4, fixed_abs, tag = 'smem constant byte address 0x4 - core index']
  #allocation1 [shape = 'u32[144,128]{1,0:T(1,128)}', space=vmem, size = 0x12000, scoped, tag = 'internal scratch']
  #allocation2 [shape = 'f32[8,32]{1,0:T(8,128)}', space=vmem, size = 0x1000, scoped, tag = 'scratch operand']
  %s0 = inlined_call_operand.vmem [shape: bf16[2,8,32], index: 0, kind: input, shape index: {}]
  %s1 = inlined_call_operand.vmem [shape: bf16[8,32,4], index: 1, kind: input, shape index: {}]
  %s2 = inlined_call_operand.vmem [shape: bf16[8,32,4], index: 2, kind: input, shape index: {}]
  %s3 = inlined_call_operand.vmem [shape: bf16[8,32,4], index: 3, kind: input, shape index: {}]
  %s4 = inlined_call_operand.vmem [shape: bf16[8,4,32], index: 4, kind: input, shape index: {}]
  %s5 = inlined_call_operand.vmem [shape: f32[1,32], index: 5, kind: input, shape index: {}]
  %s6 = inlined_call_operand.hbm [shape: f32[2,8,32], index: 6, kind: output, shape index: {0}]
  %s7 = inlined_call_operand.hbm [shape: f32[2,8,8,8], index: 7, kind: output, shape index: {1}]
  %8 = xla_tuple %s6, %s7
  %s9 = sld [smem:[#allocation0]]
  $region73: #{tpu_custom_call.1} parent=0
    _
  %s11 = ssub.s32 1, %s9
  %s12 = scalar_select 0, %s11, %s9
  $region1: #{tpu_custom_call.1} parent=0
    #allocation3 [shape = 'u8[8192]{0}', space=vmem, size = 0x2000, scoped, tag = 'output window, operand 0']
    #allocation4 [shape = 's32[2]{0}', space=sflag, size = 0x8, scoped, tag = 'scoped memory for tpu_custom_call.1']
    #allocation5 [shape = 'u8[8192]{0}', space=vmem, size = 0x2000, scoped, tag = 'output window, operand 1']
    #allocation6 [shape = 's32[2]{0}', space=sflag, size = 0x8, scoped, tag = 'scoped memory for tpu_custom_call.1']
    %13 = vsyncpa [#allocation4], 0
    %s14 = scalar_lea.sflag [#allocation4], 1
    %15 = vsyncpa %s14, 0
    %16 = vsyncpa [#allocation6], 0
    %s17 = scalar_lea.sflag [#allocation6], 1
    %18 = vsyncpa %s17, 0
    loop: start=0, step=1, limit=18
    $region2: #{tpu_custom_call.1} parent=1 // loop_pre_header
      _
    $region3: #{tpu_custom_call.1} parent=1 // loop_header
      %s20 = sphi 0, %s24
      %p21 = scmp.ge.s32.totalorder %s20, 18
      %s27 = sphi 0, %s39
      %s28 = sphi 0, %s35
      %s29 = sphi 0, %s27
      %s30 = sphi 0, %s28
      %s31 = sphi 0, %s29
      %s32 = sphi 0, %s30
      %s42 = sphi 0, %s44
      %s45 = sphi 0, %s42
      %s46 = sphi 0, %s45
      %s62 = sphi 0, %s46
      %s68 = sphi 0, %s70
      %s71 = sphi 0, %s68
      %s72 = sphi 0, %s71
      %s88 = sphi 0, %s72
      %s94 = sphi 0, %s96
      %s97 = sphi 0, %s94
      %s98 = sphi 0, %s97
      %s114 = sphi 0, %s98
      %s120 = sphi 0, %s122
      %s123 = sphi 0, %s120
      %s124 = sphi 0, %s123
      %s140 = sphi 0, %s124
      %s146 = sphi 0, %s148
      %s149 = sphi 0, %s146
      %s150 = sphi 0, %s149
      %s166 = sphi 0, %s150
      %s170 = sphi 0, %s170
      %s172 = sphi 0, %s170
      %s173 = sphi 0, %s172
      %s187 = sphi 0, %s173
      %s193 = sphi 0, %s195
      %s196 = sphi 0, %s193
      %s197 = sphi 0, %s196
      %s213 = sphi 0, %s197
      %s221 = sphi 0, %s223
      %s224 = sphi 0, %s221
      %s225 = sphi 0, %s224
      %s241 = sphi 0, %s225
    $region4: #{tpu_custom_call.1} parent=1 // loop_header_branch
      %23 = sbr.rel (%p21) target = $region8
    $region5: #{tpu_custom_call.1} parent=1 // loop_body
      %s25 = ssub.s32 %s20, 1
      %s26 = ssub.s32 %s20, 2
      %s33 = sadd.s32 1, %s28
      %p34 = scmp.ge.s32.totalorder %s33, 8
      %s35 = scalar_select %p34, 0, %s33
      %s36 = sadd.s32 1, %s27
      %s37 = scalar_select %p34, %s36, %s27
      %p38 = scmp.ge.s32.totalorder %s37, 2
      %s39 = scalar_select %p38, 0, %s37
      %s40 = ssub.s32 %s27, %s39
      %p41 = scmp.eq.s32.totalorder %s40, 0
      %s43 = sadd.s32 %s42, 1
      %s44 = scalar_select %p41, %s42, %s43
      %p47 = pneg %p41
      %p48 = scmp.eq.s32.totalorder %s20, 15
      %p49 = por %p47, %p48
      %p50 = scmp.ne.s32.totalorder %s42, %s45
      %p51 = scmp.eq.s32.totalorder %s20, 0
      %p52 = por %p50, %p51
      %p53 = scmp.ne.s32.totalorder %s42, %s45
      %p54 = scmp.eq.s32.totalorder %s25, 15
      %p55 = por %p53, %p54
      %p56 = scmp.ne.s32.totalorder %s45, %s46
      %p57 = scmp.eq.s32.totalorder %s25, 0
      %p58 = por %p56, %p57
      %p59 = scmp.ne.s32.totalorder %s45, %s46
      %p60 = scmp.eq.s32.totalorder %s26, 15
      %p61 = por %p59, %p60
      %p63 = scmp.ne.s32.totalorder %s46, %s62
      %p64 = scmp.eq.s32.totalorder %s26, 0
      %p65 = por %p63, %p64
      %s66 = ssub.s32 %s28, %s35
      %p67 = scmp.eq.s32.totalorder %s66, 0
      %s69 = sadd.s32 %s68, 1
      %s70 = scalar_select %p67, %s68, %s69
      %p73 = pneg %p67
      %p74 = scmp.eq.s32.totalorder %s20, 15
      %p75 = por %p73, %p74
      %p76 = scmp.ne.s32.totalorder %s68, %s71
      %p77 = scmp.eq.s32.totalorder %s20, 0
      %p78 = por %p76, %p77
      %p79 = scmp.ne.s32.totalorder %s68, %s71
      %p80 = scmp.eq.s32.totalorder %s25, 15
      %p81 = por %p79, %p80
      %p82 = scmp.ne.s32.totalorder %s71, %s72
      %p83 = scmp.eq.s32.totalorder %s25, 0
      %p84 = por %p82, %p83
      %p85 = scmp.ne.s32.totalorder %s71, %s72
      %p86 = scmp.eq.s32.totalorder %s26, 15
      %p87 = por %p85, %p86
      %p89 = scmp.ne.s32.totalorder %s72, %s88
      %p90 = scmp.eq.s32.totalorder %s26, 0
      %p91 = por %p89, %p90
      %s92 = ssub.s32 %s28, %s35
      %p93 = scmp.eq.s32.totalorder %s92, 0
      %s95 = sadd.s32 %s94, 1
      %s96 = scalar_select %p93, %s94, %s95
      %p99 = pneg %p93
      %p100 = scmp.eq.s32.totalorder %s20, 15
      %p101 = por %p99, %p100
      %p102 = scmp.ne.s32.totalorder %s94, %s97
      %p103 = scmp.eq.s32.totalorder %s20, 0
      %p104 = por %p102, %p103
      %p105 = scmp.ne.s32.totalorder %s94, %s97
      %p106 = scmp.eq.s32.totalorder %s25, 15
      %p107 = por %p105, %p106
      %p108 = scmp.ne.s32.totalorder %s97, %s98
      %p109 = scmp.eq.s32.totalorder %s25, 0
      %p110 = por %p108, %p109
      %p111 = scmp.ne.s32.totalorder %s97, %s98
      %p112 = scmp.eq.s32.totalorder %s26, 15
      %p113 = por %p111, %p112
      %p115 = scmp.ne.s32.totalorder %s98, %s114
      %p116 = scmp.eq.s32.totalorder %s26, 0
      %p117 = por %p115, %p116
      %s118 = ssub.s32 %s28, %s35
      %p119 = scmp.eq.s32.totalorder %s118, 0
      %s121 = sadd.s32 %s120, 1
      %s122 = scalar_select %p119, %s120, %s121
      %p125 = pneg %p119
      %p126 = scmp.eq.s32.totalorder %s20, 15
      %p127 = por %p125, %p126
      %p128 = scmp.ne.s32.totalorder %s120, %s123
      %p129 = scmp.eq.s32.totalorder %s20, 0
      %p130 = por %p128, %p129
      %p131 = scmp.ne.s32.totalorder %s120, %s123
      %p132 = scmp.eq.s32.totalorder %s25, 15
      %p133 = por %p131, %p132
      %p134 = scmp.ne.s32.totalorder %s123, %s124
      %p135 = scmp.eq.s32.totalorder %s25, 0
      %p136 = por %p134, %p135
      %p137 = scmp.ne.s32.totalorder %s123, %s124
      %p138 = scmp.eq.s32.totalorder %s26, 15
      %p139 = por %p137, %p138
      %p141 = scmp.ne.s32.totalorder %s124, %s140
      %p142 = scmp.eq.s32.totalorder %s26, 0
      %p143 = por %p141, %p142
      %s144 = ssub.s32 %s28, %s35
      %p145 = scmp.eq.s32.totalorder %s144, 0
      %s147 = sadd.s32 %s146, 1
      %s148 = scalar_select %p145, %s146, %s147
      %p151 = pneg %p145
      %p152 = scmp.eq.s32.totalorder %s20, 15
      %p153 = por %p151, %p152
      %p154 = scmp.ne.s32.totalorder %s146, %s149
      %p155 = scmp.eq.s32.totalorder %s20, 0
      %p156 = por %p154, %p155
      %p157 = scmp.ne.s32.totalorder %s146, %s149
      %p158 = scmp.eq.s32.totalorder %s25, 15
      %p159 = por %p157, %p158
      %p160 = scmp.ne.s32.totalorder %s149, %s150
      %p161 = scmp.eq.s32.totalorder %s25, 0
      %p162 = por %p160, %p161
      %p163 = scmp.ne.s32.totalorder %s149, %s150
      %p164 = scmp.eq.s32.totalorder %s26, 15
      %p165 = por %p163, %p164
      %p167 = scmp.ne.s32.totalorder %s150, %s166
      %p168 = scmp.eq.s32.totalorder %s26, 0
      %p169 = por %p167, %p168
      %s171 = sadd.s32 %s170, 1
      %p174 = scmp.eq.s32.totalorder %s20, 15
      %p175 = scmp.ne.s32.totalorder %s170, %s172
      %p176 = scmp.eq.s32.totalorder %s20, 0
      %p177 = por %p175, %p176
      %p178 = scmp.ne.s32.totalorder %s170, %s172
      %p179 = scmp.eq.s32.totalorder %s25, 15
      %p180 = por %p178, %p179
      %p181 = scmp.ne.s32.totalorder %s172, %s173
      %p182 = scmp.eq.s32.totalorder %s25, 0
      %p183 = por %p181, %p182
      %p184 = scmp.ne.s32.totalorder %s172, %s173
      %p185 = scmp.eq.s32.totalorder %s26, 15
      %p186 = por %p184, %p185
      %p188 = scmp.ne.s32.totalorder %s173, %s187
      %p189 = scmp.eq.s32.totalorder %s26, 0
      %p190 = por %p188, %p189
      %s191 = ssub.s32 %s27, %s39
      %p192 = scmp.eq.s32.totalorder %s191, 0
      %s194 = sadd.s32 %s193, 1
      %s195 = scalar_select %p192, %s193, %s194
      %p198 = pneg %p192
      %p199 = scmp.eq.s32.totalorder %s20, 15
      %p200 = por %p198, %p199
      %p201 = scmp.ne.s32.totalorder %s193, %s196
      %p202 = scmp.eq.s32.totalorder %s20, 0
      %p203 = por %p201, %p202
      %p204 = scmp.ne.s32.totalorder %s193, %s196
      %p205 = scmp.eq.s32.totalorder %s25, 15
      %p206 = por %p204, %p205
      %p207 = scmp.ne.s32.totalorder %s196, %s197
      %p208 = scmp.eq.s32.totalorder %s25, 0
      %p209 = por %p207, %p208
      %p210 = scmp.ne.s32.totalorder %s196, %s197
      %p211 = scmp.eq.s32.totalorder %s26, 15
      %p212 = por %p210, %p211
      %p214 = scmp.ne.s32.totalorder %s197, %s213
      %p215 = scmp.eq.s32.totalorder %s26, 0
      %p216 = por %p214, %p215
      %s217 = ssub.s32 %s27, %s39
      %s218 = ssub.s32 %s28, %s35
      %s219 = sor.u32 %s217, %s218
      %p220 = scmp.eq.s32.totalorder %s219, 0
      %s222 = sadd.s32 %s221, 1
      %s223 = scalar_select %p220, %s221, %s222
      %p226 = pneg %p220
      %p227 = scmp.eq.s32.totalorder %s20, 15
      %p228 = por %p226, %p227
      %p229 = scmp.ne.s32.totalorder %s221, %s224
      %p230 = scmp.eq.s32.totalorder %s20, 0
      %p231 = por %p229, %p230
      %p232 = scmp.ne.s32.totalorder %s221, %s224
      %p233 = scmp.eq.s32.totalorder %s25, 15
      %p234 = por %p232, %p233
      %p235 = scmp.ne.s32.totalorder %s224, %s225
      %p236 = scmp.eq.s32.totalorder %s25, 0
      %p237 = por %p235, %p236
      %p238 = scmp.ne.s32.totalorder %s224, %s225
      %p239 = scmp.eq.s32.totalorder %s26, 15
      %p240 = por %p238, %p239
      %p242 = scmp.ne.s32.totalorder %s225, %s241
      %p243 = scmp.eq.s32.totalorder %s26, 0
      %p244 = por %p242, %p243
      %p245 = scmp.le.s32.totalorder 1, %s20
      %p246 = scmp.lt.s32.totalorder %s20, 17
      %p247 = pnand %p245, %p246
      %p248 = pneg %p247
      // Predicated region
      $region9: #{tpu_custom_call.1} parent=5 // pred_check
        _
      $region10: #{tpu_custom_call.1} parent=5 // pred_check_branch
        %250 = sbr.rel (%p247) target = $region12
      $region11: #{tpu_custom_call.1} parent=5 // pred_region
        %s251 = ssub.s32 %s20, 1
        // Predicated region
        $region13: #{tpu_custom_call.1} parent=11 // pred_check
          %p252 = pneg %p183
        $region14: #{tpu_custom_call.1} parent=11 // pred_check_branch
          %254 = sbr.rel (%p252) target = $region16
        $region15: #{tpu_custom_call.1} parent=11 // pred_region
          _
        $region16: #{tpu_custom_call.1} parent=11 // pred_fallthru
          _
      $region12: #{tpu_custom_call.1} parent=5 // pred_fallthru
        _
      %p255 = scmp.lt.s32.totalorder %s20, 16
      // Predicated region
      $region17: #{tpu_custom_call.1} parent=5 // pred_check
        %p256 = pneg %p255
      $region18: #{tpu_custom_call.1} parent=5 // pred_check_branch
        %258 = sbr.rel (%p256) target = $region20
      $region19: #{tpu_custom_call.1} parent=5 // pred_region
        // Predicated region
        $region21: #{tpu_custom_call.1} parent=19 // pred_check
          %p259 = pneg %p52
        $region22: #{tpu_custom_call.1} parent=19 // pred_check_branch
          %261 = sbr.rel (%p259) target = $region24
        $region23: #{tpu_custom_call.1} parent=19 // pred_region
          %p262 = scmp.lt.s32.totalorder %s27, 1
          %s263 = scalar_select %p262, %s27, 1
          %s264 = smul.addr %s263, 4
          %s265 = scalar_lea.vmem %s0, %s264
        $region24: #{tpu_custom_call.1} parent=19 // pred_fallthru
          _
        // Predicated region
        $region25: #{tpu_custom_call.1} parent=19 // pred_check
          %p266 = pneg %p78
        $region26: #{tpu_custom_call.1} parent=19 // pred_check_branch
          %268 = sbr.rel (%p266) target = $region28
        $region27: #{tpu_custom_call.1} parent=19 // pred_region
          %p269 = scmp.lt.s32.totalorder %s28, 7
          %s270 = scalar_select %p269, %s28, 7
          %s271 = smul.addr %s270, 4
          %s272 = smul.addr %s271, 4
          %s273 = scalar_lea.vmem %s1, %s272
        $region28: #{tpu_custom_call.1} parent=19 // pred_fallthru
          _
        // Predicated region
        $region29: #{tpu_custom_call.1} parent=19 // pred_check
          %p274 = pneg %p104
        $region30: #{tpu_custom_call.1} parent=19 // pred_check_branch
          %276 = sbr.rel (%p274) target = $region32
        $region31: #{tpu_custom_call.1} parent=19 // pred_region
          %p277 = scmp.lt.s32.totalorder %s28, 7
          %s278 = scalar_select %p277, %s28, 7
          %s279 = smul.addr %s278, 4
          %s280 = smul.addr %s279, 4
          %s281 = scalar_lea.vmem %s2, %s280
        $region32: #{tpu_custom_call.1} parent=19 // pred_fallthru
          _
        // Predicated region
        $region33: #{tpu_custom_call.1} parent=19 // pred_check
          %p282 = pneg %p130
        $region34: #{tpu_custom_call.1} parent=19 // pred_check_branch
          %284 = sbr.rel (%p282) target = $region36
        $region35: #{tpu_custom_call.1} parent=19 // pred_region
          %p285 = scmp.lt.s32.totalorder %s28, 7
          %s286 = scalar_select %p285, %s28, 7
          %s287 = smul.addr %s286, 4
          %s288 = smul.addr %s287, 4
          %s289 = scalar_lea.vmem %s3, %s288
        $region36: #{tpu_custom_call.1} parent=19 // pred_fallthru
          _
        // Predicated region
        $region37: #{tpu_custom_call.1} parent=19 // pred_check
          %p290 = pneg %p156
        $region38: #{tpu_custom_call.1} parent=19 // pred_check_branch
          %292 = sbr.rel (%p290) target = $region40
        $region39: #{tpu_custom_call.1} parent=19 // pred_region
          %p293 = scmp.lt.s32.totalorder %s28, 7
          %s294 = scalar_select %p293, %s28, 7
          %s295 = smul.addr %s294, 2
          %s296 = scalar_lea.vmem %s4, %s295
        $region40: #{tpu_custom_call.1} parent=19 // pred_fallthru
          _
      $region20: #{tpu_custom_call.1} parent=5 // pred_fallthru
        _
      %p297 = scmp.le.s32.totalorder 1, %s20
      %p298 = scmp.lt.s32.totalorder %s20, 17
      %p299 = pnand %p297, %p298
      %p300 = pneg %p299
      // Predicated region
      $region41: #{tpu_custom_call.1} parent=5 // pred_check
        _
      $region42: #{tpu_custom_call.1} parent=5 // pred_check_branch
        %302 = sbr.rel (%p299) target = $region44
      $region43: #{tpu_custom_call.1} parent=5 // pred_region
        %s303 = ssub.s32 %s20, 1
        %p304 = scmp.lt.s32.totalorder %s29, 1
        %s305 = scalar_select %p304, %s29, 1
        %s306 = smul.addr %s305, 4
        %s307 = scalar_lea.vmem %s0, %s306
        %p308 = pneg %p58
        %p309 = pneg %p55
        %p310 = scmp.lt.s32.totalorder %s30, 7
        %s311 = scalar_select %p310, %s30, 7
        %s312 = smul.addr %s311, 4
        %s313 = smul.addr %s312, 4
        %s314 = scalar_lea.vmem %s1, %s313
        %p315 = pneg %p84
        %p316 = pneg %p81
        %p317 = scmp.lt.s32.totalorder %s30, 7
        %s318 = scalar_select %p317, %s30, 7
        %s319 = smul.addr %s318, 4
        %s320 = smul.addr %s319, 4
        %s321 = scalar_lea.vmem %s2, %s320
        %p322 = pneg %p110
        %p323 = pneg %p107
        %p324 = scmp.lt.s32.totalorder %s30, 7
        %s325 = scalar_select %p324, %s30, 7
        %s326 = smul.addr %s325, 4
        %s327 = smul.addr %s326, 4
        %s328 = scalar_lea.vmem %s3, %s327
        %p329 = pneg %p136
        %p330 = pneg %p133
        %p331 = scmp.lt.s32.totalorder %s30, 7
        %s332 = scalar_select %p331, %s30, 7
        %s333 = smul.addr %s332, 2
        %s334 = scalar_lea.vmem %s4, %s333
        %p335 = pneg %p162
        %p336 = pneg %p159
        %p337 = pneg %p183
        %p338 = pneg %p180
        %p339 = pneg %p209
        %p340 = pneg %p206
        %s341 = sand.u32 %s196, 1
        %s342 = scalar_lea.sflag [#allocation4], %s341
        %s343 = sand.u32 %s196, 1
        %s344 = smul.addr %s343, 8
        %s345 = scalar_lea.vmem [#allocation3], %s344
        %p346 = pneg %p237
        %p347 = pneg %p234
        %s348 = sand.u32 %s224, 1
        %s349 = scalar_lea.sflag [#allocation6], %s348
        %s350 = sand.u32 %s224, 1
        %s351 = smul.addr %s350, 8
        %s352 = scalar_lea.vmem [#allocation5], %s351
        %p353 = scmp.lt.s32.totalorder %s29, 1
        %s354 = scalar_select %p353, %s29, 1
        %s355 = smul.addr %s354, 4
        %s356 = scalar_lea.vmem %s0, %s355
        %p357 = scmp.lt.s32.totalorder %s30, 7
        %s358 = scalar_select %p357, %s30, 7
        %s359 = smul.addr %s358, 4
        %s360 = smul.addr %s359, 4
        %s361 = scalar_lea.vmem %s1, %s360
        %p362 = scmp.lt.s32.totalorder %s30, 7
        %s363 = scalar_select %p362, %s30, 7
        %s364 = smul.addr %s363, 4
        %s365 = smul.addr %s364, 4
        %s366 = scalar_lea.vmem %s2, %s365
        %p367 = scmp.lt.s32.totalorder %s30, 7
        %s368 = scalar_select %p367, %s30, 7
        %s369 = smul.addr %s368, 4
        %s370 = smul.addr %s369, 4
        %s371 = scalar_lea.vmem %s3, %s370
        %p372 = scmp.lt.s32.totalorder %s30, 7
        %s373 = scalar_select %p372, %s30, 7
        %s374 = smul.addr %s373, 2
        %s375 = scalar_lea.vmem %s4, %s374
        %v377 = vld [vmem:[%s356] sm:$0xf]
        %v378 = vld [vmem:[%s361] sm:$0xf]
        %v379 = vld [vmem:[%s361 + $0x4] sm:$0xf]
        %v380 = vld [vmem:[%s361 + $0x8] sm:$0xf]
        %v381 = vld [vmem:[%s361 + $0xc] sm:$0xf]
        %v382 = vld [vmem:[%s366] sm:$0xf]
        %v383 = vld [vmem:[%s366 + $0x4] sm:$0xf]
        %v384 = vld [vmem:[%s366 + $0x8] sm:$0xf]
        %v385 = vld [vmem:[%s366 + $0xc] sm:$0xf]
        %v386 = vld [vmem:[%s371] sm:$0xf]
        %v387 = vld [vmem:[%s371 + $0x4] sm:$0xf]
        %v388 = vld [vmem:[%s371 + $0x8] sm:$0xf]
        %v389 = vld [vmem:[%s371 + $0xc] sm:$0xf]
        %v394 = vunpack.c.l.b16 %v378
        %v395 = vunpack.c.l.b16 %v379
        %v396 = vunpack.c.l.b16 %v380
        %v397 = vunpack.c.l.b16 %v381
        %v398 = vpack.c.b16 %v395, %v394
        %v399 = vpack.c.b16 %v397, %v396
        %vm402 = vcmask 261120
        %v404 = vsel %vm402, %v377, 0
        %406 = vmatprep.subr.bf16.mxu0 0
        %407 = vmatpush1.bf16.msra.mxu0 %v398
        %408 = vmatprep.subr.bf16.mxu0 0
        %409 = vmatpush1.bf16.msra.mxu0 %v399
        %410 = vmatprep.subr.bf16.mxu0 0
        %411 = vmatpush1.bf16.msra.mxu0 0
        %412 = vmatprep.subr.bf16.mxu0 0
        %413 = vmatpush1.bf16.msra.mxu0 0
        %414 = vmatprep.subr.bf16.mxu0 0
        %415 = vmatpush1.bf16.msra.mxu0 0
        %416 = vmatprep.subr.bf16.mxu0 0
        %417 = vmatpush1.bf16.msra.mxu0 0
        %418 = vmatprep.subr.bf16.mxu0 0
        %419 = vmatpush1.bf16.msra.mxu0 0
        %420 = vmatprep.subr.bf16.mxu0 0
        %421 = vmatpush1.bf16.msra.mxu0 0
        %422 = vmatprep.subr.bf16.mxu0 0
        %423 = vmatpush1.bf16.msra.mxu0 0
        %424 = vmatprep.subr.bf16.mxu0 0
        %425 = vmatpush1.bf16.msra.mxu0 0
        %426 = vmatprep.subr.bf16.mxu0 0
        %427 = vmatpush1.bf16.msra.mxu0 0
        %428 = vmatprep.subr.bf16.mxu0 0
        %429 = vmatpush1.bf16.msra.mxu0 0
        %430 = vmatprep.subr.bf16.mxu0 0
        %431 = vmatpush1.bf16.msra.mxu0 0
        %432 = vmatprep.subr.bf16.mxu0 0
        %433 = vmatpush1.bf16.msra.mxu0 0
        %434 = vmatprep.subr.bf16.mxu0 0
        %435 = vmatpush1.bf16.msra.mxu0 0
        %436 = vmatprep.subr.bf16.mxu0 0
        %437 = vmatpush1.bf16.msra.mxu0 0
        %438 = vmatprep.mubr.bf16.mxu0 0
        %439 = vmatmul.mubr.bf16.gmra.mrb[0].mxu0 %v404
        %v440 = vpop.f32.mrb[0].mxu0
        %v441 = vadd.f32 0.0, %v440
        %v442 = vpop.f32.mrb[0].mxu0
        %v443 = vpop.f32.mrb[0].mxu0
        %v444 = vpop.f32.mrb[0].mxu0
        %445 = vdwg.mxu0
        %v450 = vunpack.c.l.b16 %v382
        %v451 = vunpack.c.l.b16 %v383
        %v452 = vunpack.c.l.b16 %v384
        %v453 = vunpack.c.l.b16 %v385
        %v454 = vpack.c.b16 %v451, %v450
        %v455 = vpack.c.b16 %v453, %v452
        %458 = vmatprep.subr.bf16.mxu0 0
        %459 = vmatpush1.bf16.msra.mxu0 %v454
        %460 = vmatprep.subr.bf16.mxu0 0
        %461 = vmatpush1.bf16.msra.mxu0 %v455
        %462 = vmatprep.subr.bf16.mxu0 0
        %463 = vmatpush1.bf16.msra.mxu0 0
        %464 = vmatprep.subr.bf16.mxu0 0
        %465 = vmatpush1.bf16.msra.mxu0 0
        %466 = vmatprep.subr.bf16.mxu0 0
        %467 = vmatpush1.bf16.msra.mxu0 0
        %468 = vmatprep.subr.bf16.mxu0 0
        %469 = vmatpush1.bf16.msra.mxu0 0
        %470 = vmatprep.subr.bf16.mxu0 0
        %471 = vmatpush1.bf16.msra.mxu0 0
        %472 = vmatprep.subr.bf16.mxu0 0
        %473 = vmatpush1.bf16.msra.mxu0 0
        %474 = vmatprep.subr.bf16.mxu0 0
        %475 = vmatpush1.bf16.msra.mxu0 0
        %476 = vmatprep.subr.bf16.mxu0 0
        %477 = vmatpush1.bf16.msra.mxu0 0
        %478 = vmatprep.subr.bf16.mxu0 0
        %479 = vmatpush1.bf16.msra.mxu0 0
        %480 = vmatprep.subr.bf16.mxu0 0
        %481 = vmatpush1.bf16.msra.mxu0 0
        %482 = vmatprep.subr.bf16.mxu0 0
        %483 = vmatpush1.bf16.msra.mxu0 0
        %484 = vmatprep.subr.bf16.mxu0 0
        %485 = vmatpush1.bf16.msra.mxu0 0
        %486 = vmatprep.subr.bf16.mxu0 0
        %487 = vmatpush1.bf16.msra.mxu0 0
        %488 = vmatprep.subr.bf16.mxu0 0
        %489 = vmatpush1.bf16.msra.mxu0 0
        %490 = vmatprep.mubr.bf16.mxu0 0
        %491 = vmatmul.mubr.bf16.gmra.mrb[0].mxu0 %v404
        %v492 = vpop.f32.mrb[0].mxu0
        %v493 = vadd.f32 0.0, %v492
        %v494 = vpop.f32.mrb[0].mxu0
        %v495 = vpop.f32.mrb[0].mxu0
        %v496 = vpop.f32.mrb[0].mxu0
        %497 = vdwg.mxu0
        %v502 = vunpack.c.l.b16 %v386
        %v503 = vunpack.c.l.b16 %v387
        %v504 = vunpack.c.l.b16 %v388
        %v505 = vunpack.c.l.b16 %v389
        %v506 = vpack.c.b16 %v503, %v502
        %v507 = vpack.c.b16 %v505, %v504
        %510 = vmatprep.subr.bf16.mxu0 0
        %511 = vmatpush1.bf16.msra.mxu0 %v506
        %512 = vmatprep.subr.bf16.mxu0 0
        %513 = vmatpush1.bf16.msra.mxu0 %v507
        %514 = vmatprep.subr.bf16.mxu0 0
        %515 = vmatpush1.bf16.msra.mxu0 0
        %516 = vmatprep.subr.bf16.mxu0 0
        %517 = vmatpush1.bf16.msra.mxu0 0
        %518 = vmatprep.subr.bf16.mxu0 0
        %519 = vmatpush1.bf16.msra.mxu0 0
        %520 = vmatprep.subr.bf16.mxu0 0
        %521 = vmatpush1.bf16.msra.mxu0 0
        %522 = vmatprep.subr.bf16.mxu0 0
        %523 = vmatpush1.bf16.msra.mxu0 0
        %524 = vmatprep.subr.bf16.mxu0 0
        %525 = vmatpush1.bf16.msra.mxu0 0
        %526 = vmatprep.subr.bf16.mxu0 0
        %527 = vmatpush1.bf16.msra.mxu0 0
        %528 = vmatprep.subr.bf16.mxu0 0
        %529 = vmatpush1.bf16.msra.mxu0 0
        %530 = vmatprep.subr.bf16.mxu0 0
        %531 = vmatpush1.bf16.msra.mxu0 0
        %532 = vmatprep.subr.bf16.mxu0 0
        %533 = vmatpush1.bf16.msra.mxu0 0
        %534 = vmatprep.subr.bf16.mxu0 0
        %535 = vmatpush1.bf16.msra.mxu0 0
        %536 = vmatprep.subr.bf16.mxu0 0
        %537 = vmatpush1.bf16.msra.mxu0 0
        %538 = vmatprep.subr.bf16.mxu0 0
        %539 = vmatpush1.bf16.msra.mxu0 0
        %540 = vmatprep.subr.bf16.mxu0 0
        %541 = vmatpush1.bf16.msra.mxu0 0
        %542 = vmatprep.mubr.bf16.mxu0 0
        %543 = vmatmul.mubr.bf16.gmra.mrb[0].mxu0 %v404
        %v544 = vpop.f32.mrb[0].mxu0
        %v545 = vadd.f32 0.0, %v544
        %v546 = vpop.f32.mrb[0].mxu0
        %v547 = vpop.f32.mrb[0].mxu0
        %v548 = vpop.f32.mrb[0].mxu0
        %549 = vdwg.mxu0
        %v550 = vpack.c.bf16 %v441, %v441
        %v551 = vpack.c.bf16 %v493, %v493
        %vm552 = vcmask 31744
        %v554 = vsel %vm552, %v550, 0
        %v557 = vsel %vm552, %v551, 0
        %559 = vmatprep.subr.bf16.mxu0 0
        %560 = vmatpush1.bf16.xpose.msra.mxu0 %v557
        %561 = vmatprep.subr.bf16.mxu0 0
        %562 = vmatpush1.bf16.xpose.msra.mxu0 0
        %563 = vmatprep.subr.bf16.mxu0 0
        %564 = vmatpush1.bf16.xpose.msra.mxu0 0
        %565 = vmatprep.subr.bf16.mxu0 0
        %566 = vmatpush1.bf16.xpose.msra.mxu0 0
        %567 = vmatprep.subr.bf16.mxu0 0
        %568 = vmatpush1.bf16.xpose.msra.mxu0 0
        %569 = vmatprep.subr.bf16.mxu0 0
        %570 = vmatpush1.bf16.xpose.msra.mxu0 0
        %571 = vmatprep.subr.bf16.mxu0 0
        %572 = vmatpush1.bf16.xpose.msra.mxu0 0
        %573 = vmatprep.subr.bf16.mxu0 0
        %574 = vmatpush1.bf16.xpose.msra.mxu0 0
        %575 = vmatprep.subr.bf16.mxu0 0
        %576 = vmatpush1.bf16.xpose.msra.mxu0 0
        %577 = vmatprep.subr.bf16.mxu0 0
        %578 = vmatpush1.bf16.xpose.msra.mxu0 0
        %579 = vmatprep.subr.bf16.mxu0 0
        %580 = vmatpush1.bf16.xpose.msra.mxu0 0
        %581 = vmatprep.subr.bf16.mxu0 0
        %582 = vmatpush1.bf16.xpose.msra.mxu0 0
        %583 = vmatprep.subr.bf16.mxu0 0
        %584 = vmatpush1.bf16.xpose.msra.mxu0 0
        %585 = vmatprep.subr.bf16.mxu0 0
        %586 = vmatpush1.bf16.xpose.msra.mxu0 0
        %587 = vmatprep.subr.bf16.mxu0 0
        %588 = vmatpush1.bf16.xpose.msra.mxu0 0
        %589 = vmatprep.subr.bf16.mxu0 0
        %590 = vmatpush1.bf16.xpose.msra.mxu0 0
        %591 = vmatprep.mubr.bf16.mxu0 0
        %592 = vmatmul.mubr.bf16.gmra.mrb[0].mxu0 %v554
        %v593 = vpop.f32.mrb[0].mxu0
        %v594 = vadd.f32 0.0, %v593
        %v595 = vpop.f32.mrb[0].mxu0
        %v596 = vpop.f32.mrb[0].mxu0
        %v597 = vpop.f32.mrb[0].mxu0
        %598 = vdwg.mxu0
        %vm599 = vcmask 64512
        %v600 = vsel %vm599, %v594, -inf
        %601 = vmax.xlane.f32.xlu0 %v600
        %v602 = vpop.xlane.xlu0 %601
        %v603 = vsub.f32 %v594, %v602
        %v604 = vmul.f32 %v603, 1.442695
        %v605 = vpow.pop %v604
        %v606 = vsel %vm599, %v605, 0.0
        %607 = vadd.xlane.f32.xlu0 %v606
        %v608 = vpop.xlane.xlu0 %607
        %v609 = vrcp.pop %v608
        %v610 = vmul.f32 %v605, %v609
        %611 = vst.msk [vmem:[%s352] sm:$0xff] %vm599, %v610
        %v612 = vpack.c.bf16 %v610, %v610
        %v613 = vpack.c.bf16 %v545, %v545
        %v615 = vsel %vm599, %v612, 0
        %vm617 = vcmask 1043456
        %v619 = vsel %vm617, %v613, 0
        %621 = vmatprep.subr.bf16.mxu0 0
        %622 = vmatpush1.bf16.msra.mxu0 %v619
        %623 = vmatprep.subr.bf16.mxu0 0
        %624 = vmatpush1.bf16.msra.mxu0 0
        %625 = vmatprep.subr.bf16.mxu0 0
        %626 = vmatpush1.bf16.msra.mxu0 0
        %627 = vmatprep.subr.bf16.mxu0 0
        %628 = vmatpush1.bf16.msra.mxu0 0
        %629 = vmatprep.subr.bf16.mxu0 0
        %630 = vmatpush1.bf16.msra.mxu0 0
        %631 = vmatprep.subr.bf16.mxu0 0
        %632 = vmatpush1.bf16.msra.mxu0 0
        %633 = vmatprep.subr.bf16.mxu0 0
        %634 = vmatpush1.bf16.msra.mxu0 0
        %635 = vmatprep.subr.bf16.mxu0 0
        %636 = vmatpush1.bf16.msra.mxu0 0
        %637 = vmatprep.subr.bf16.mxu0 0
        %638 = vmatpush1.bf16.msra.mxu0 0
        %639 = vmatprep.subr.bf16.mxu0 0
        %640 = vmatpush1.bf16.msra.mxu0 0
        %641 = vmatprep.subr.bf16.mxu0 0
        %642 = vmatpush1.bf16.msra.mxu0 0
        %643 = vmatprep.subr.bf16.mxu0 0
        %644 = vmatpush1.bf16.msra.mxu0 0
        %645 = vmatprep.subr.bf16.mxu0 0
        %646 = vmatpush1.bf16.msra.mxu0 0
        %647 = vmatprep.subr.bf16.mxu0 0
        %648 = vmatpush1.bf16.msra.mxu0 0
        %649 = vmatprep.subr.bf16.mxu0 0
        %650 = vmatpush1.bf16.msra.mxu0 0
        %651 = vmatprep.subr.bf16.mxu0 0
        %652 = vmatpush1.bf16.msra.mxu0 0
        %653 = vmatprep.mubr.bf16.mxu0 0
        %654 = vmatmul.mubr.bf16.gmra.mrb[0].mxu0 %v615
        %v655 = vpop.f32.mrb[0].mxu0
        %v656 = vadd.f32 0.0, %v655
        %v657 = vpop.f32.mrb[0].mxu0
        %v658 = vpop.f32.mrb[0].mxu0
        %v659 = vpop.f32.mrb[0].mxu0
        %660 = vdwg.mxu0
        %v661 = vpack.c.bf16 %v656, %v656
        %v662 = vld [vmem:[%s375] sm:$0x3]
        %v664 = vsel %vm552, %v661, 0
        %vm666 = vcmask 1041408
        %v668 = vsel %vm666, %v662, 0
        %670 = vmatprep.subr.bf16.mxu0 0
        %671 = vmatpush1.bf16.msra.mxu0 %v668
        %672 = vmatprep.subr.bf16.mxu0 0
        %673 = vmatpush1.bf16.msra.mxu0 0
        %674 = vmatprep.subr.bf16.mxu0 0
        %675 = vmatpush1.bf16.msra.mxu0 0
        %676 = vmatprep.subr.bf16.mxu0 0
        %677 = vmatpush1.bf16.msra.mxu0 0
        %678 = vmatprep.subr.bf16.mxu0 0
        %679 = vmatpush1.bf16.msra.mxu0 0
        %680 = vmatprep.subr.bf16.mxu0 0
        %681 = vmatpush1.bf16.msra.mxu0 0
        %682 = vmatprep.subr.bf16.mxu0 0
        %683 = vmatpush1.bf16.msra.mxu0 0
        %684 = vmatprep.subr.bf16.mxu0 0
        %685 = vmatpush1.bf16.msra.mxu0 0
        %686 = vmatprep.subr.bf16.mxu0 0
        %687 = vmatpush1.bf16.msra.mxu0 0
        %688 = vmatprep.subr.bf16.mxu0 0
        %689 = vmatpush1.bf16.msra.mxu0 0
        %690 = vmatprep.subr.bf16.mxu0 0
        %691 = vmatpush1.bf16.msra.mxu0 0
        %692 = vmatprep.subr.bf16.mxu0 0
        %693 = vmatpush1.bf16.msra.mxu0 0
        %694 = vmatprep.subr.bf16.mxu0 0
        %695 = vmatpush1.bf16.msra.mxu0 0
        %696 = vmatprep.subr.bf16.mxu0 0
        %697 = vmatpush1.bf16.msra.mxu0 0
        %698 = vmatprep.subr.bf16.mxu0 0
        %699 = vmatpush1.bf16.msra.mxu0 0
        %700 = vmatprep.subr.bf16.mxu0 0
        %701 = vmatpush1.bf16.msra.mxu0 0
        %702 = vmatprep.mubr.bf16.mxu0 0
        %703 = vmatmul.mubr.bf16.gmra.mrb[0].mxu0 %v664
        %v704 = vpop.f32.mrb[0].mxu0
        %v705 = vadd.f32 0.0, %v704
        %v706 = vpop.f32.mrb[0].mxu0
        %v707 = vpop.f32.mrb[0].mxu0
        %v708 = vpop.f32.mrb[0].mxu0
        %709 = vdwg.mxu0
        %p710 = scmp.eq.s32.totalorder %s30, 0
        // Predicated region
        $region45: #{tpu_custom_call.1} parent=43 // pred_check
          %p711 = pneg %p710
        $region46: #{tpu_custom_call.1} parent=43 // pred_check_branch
          %713 = sbr.rel (%p711) target = $region48
        $region47: #{tpu_custom_call.1} parent=43 // pred_region
          %714 = vst.msk [vmem:[#allocation2] sm:$0xff] %vm402, 0.0
        $region48: #{tpu_custom_call.1} parent=43 // pred_fallthru
          _
        %v715 = vld [vmem:[#allocation2] sm:$0xff]
        %v716 = vadd.f32 %v715, %v705
        %717 = vst.msk [vmem:[#allocation2] sm:$0xff] %vm402, %v716
        %p718 = scmp.eq.s32.totalorder %s30, 7
        // Predicated region
        $region49: #{tpu_custom_call.1} parent=43 // pred_check
          %p719 = pneg %p718
        $region50: #{tpu_custom_call.1} parent=43 // pred_check_branch
          %721 = sbr.rel (%p719) target = $region52
        $region51: #{tpu_custom_call.1} parent=43 // pred_region
          %v722 = vld [vmem:[#allocation2] sm:$0xff]
          %v723 = vld [vmem:[%s5] sm:$0x1]
          %v725 = vlaneseq
          %v726 = vshrl.u32 %v725, 7
          %v727 = vsub.s32 0, %v726
          %v728 = vrot.slane %v723, %v727
          %v730 = vadd.f32 %v722, %v728
          %731 = vst.msk [vmem:[%s345] sm:$0xff] %vm402, %v730
        $region52: #{tpu_custom_call.1} parent=43 // pred_fallthru
          _
        %s732 = sand.u32 %s196, 1
        %s733 = scalar_lea.sflag [#allocation4], %s732
        %s734 = sand.u32 %s196, 1
        %s735 = smul.addr %s734, 8
        %s736 = scalar_lea.vmem [#allocation3], %s735
        %s737 = sand.u32 %s224, 1
        %s738 = scalar_lea.sflag [#allocation6], %s737
        %s739 = sand.u32 %s224, 1
        %s740 = smul.addr %s739, 8
        %s741 = scalar_lea.vmem [#allocation5], %s740
        // Predicated region
        $region53: #{tpu_custom_call.1} parent=43 // pred_check
          %p742 = pneg %p206
        $region54: #{tpu_custom_call.1} parent=43 // pred_check_branch
          %744 = sbr.rel (%p742) target = $region56
        $region55: #{tpu_custom_call.1} parent=43 // pred_region
          %s746 = ssub.s32 128, 128
          %747 = vsyncadd %s733, %s746
          %s748 = smul.addr %s29, 128
          %s749 = scalar_lea.hbm %s6, %s748
          %s751 = sshll.u32 %s736, 4
          %s752 = int_to_ptr.vmem [resolvable:$true] %s751
          %754 = dma.vmem_to_hbm [thread:$0]  %s752, 128, %s749, %s733
        $region56: #{tpu_custom_call.1} parent=43 // pred_fallthru
          _
        // Predicated region
        $region57: #{tpu_custom_call.1} parent=43 // pred_check
          %p755 = pneg %p234
        $region58: #{tpu_custom_call.1} parent=43 // pred_check_branch
          %757 = sbr.rel (%p755) target = $region60
        $region59: #{tpu_custom_call.1} parent=43 // pred_region
          %s759 = ssub.s32 128, 128
          %760 = vsyncadd %s738, %s759
          %s761 = smul.addr %s29, 8
          %s762 = sadd.s32 %s30, %s761
          %s763 = smul.addr %s762, 128
          %s764 = scalar_lea.hbm %s7, %s763
          %s766 = sshll.u32 %s741, 4
          %s767 = int_to_ptr.vmem [resolvable:$true] %s766
          %769 = dma.vmem_to_hbm [thread:$0]  %s767, 128, %s764, %s738
        $region60: #{tpu_custom_call.1} parent=43 // pred_fallthru
          _
      $region44: #{tpu_custom_call.1} parent=5 // pred_fallthru
        _
      %p770 = scmp.le.s32.totalorder 2, %s20
      // Predicated region
      $region61: #{tpu_custom_call.1} parent=5 // pred_check
        %p771 = pneg %p770
      $region62: #{tpu_custom_call.1} parent=5 // pred_check_branch
        %773 = sbr.rel (%p771) target = $region64
      $region63: #{tpu_custom_call.1} parent=5 // pred_region
        %s774 = ssub.s32 %s20, 2
        // Predicated region
        $region65: #{tpu_custom_call.1} parent=63 // pred_check
          %p775 = pneg %p212
        $region66: #{tpu_custom_call.1} parent=63 // pred_check_branch
          %777 = sbr.rel (%p775) target = $region68
        $region67: #{tpu_custom_call.1} parent=63 // pred_region
          %s778 = sand.u32 %s197, 1
          %s779 = scalar_lea.sflag [#allocation4], %s778
          %s780 = sand.u32 %s197, 1
          %s781 = smul.addr %s780, 8
          %s782 = scalar_lea.vmem [#allocation3], %s781
          %783 = dma.done %s779, 128
        $region68: #{tpu_custom_call.1} parent=63 // pred_fallthru
          _
        // Predicated region
        $region69: #{tpu_custom_call.1} parent=63 // pred_check
          %p784 = pneg %p240
        $region70: #{tpu_custom_call.1} parent=63 // pred_check_branch
          %786 = sbr.rel (%p784) target = $region72
        $region71: #{tpu_custom_call.1} parent=63 // pred_region
          %s787 = sand.u32 %s225, 1
          %s788 = scalar_lea.sflag [#allocation6], %s787
          %s789 = sand.u32 %s225, 1
          %s790 = smul.addr %s789, 8
          %s791 = scalar_lea.vmem [#allocation5], %s790
          %792 = dma.done %s788, 128
        $region72: #{tpu_custom_call.1} parent=63 // pred_fallthru
          _
      $region64: #{tpu_custom_call.1} parent=5 // pred_fallthru
        _
    $region6: #{tpu_custom_call.1} parent=1 // loop_footer
      %s24 = sadd.s32 1, %s20
    $region7: #{tpu_custom_call.1} parent=1 // loop_footer_branch
      %19 = sbr.rel target = $region3
    $region8: #{tpu_custom_call.1} parent=1 // loop_exit
      _
    %793 = vsyncpa [#allocation4], 1
    %s794 = scalar_lea.sflag [#allocation4], 1
    %795 = vsyncpa %s794, 1
    %796 = vsyncpa [#allocation6], 1
    %s797 = scalar_lea.sflag [#allocation6], 1
    %798 = vsyncpa %s797, 1

</llo_original>
